<compile_context>
chip_gen: v7x
topology: tpu7x:2x2x1
jax: 0.10.0
libtpu: 0.0.40
codegen_flags: <defaults>
</compile_context>

<pallas_src>
import jax
import jax.numpy as jnp
from jax.experimental import pallas as pl
from jax.experimental.pallas import tpu as pltpu

CIN = 320   # efficientnet_lite0 features[-1] channel count
COUT = 2    # head output channels
LANE = 128


def head_conv1x1_kernel(b_ref, w_ref, x_ref, o_ref):
    """One (batch-block, spatial-tile) grid step of the 1x1-conv head.

    b_ref: (COUT,)           bias scalars in SMEM
    w_ref: (COUT, CIN)       weight, resident in VMEM across the grid
    x_ref: (nb, CIN, THW)    activation block, native NCHW (channels x flattened spatial)
    o_ref: (nb, COUT, THW)   lane-dense output block
    """
    nb = x_ref.shape[0]
    cout, t_hw = o_ref.shape[1], o_ref.shape[2]

    w = w_ref[...]

    # Bias tile: one row per output channel, built once per grid step (hoisted out of the
    # per-sample loop; COUT is static so this unrolls to a couple of selects).
    row = jax.lax.broadcasted_iota(jnp.int32, (cout, t_hw), 0)
    bias = jnp.full((cout, t_hw), b_ref[0], jnp.float32)
    for c in range(1, cout):
        bias = jnp.where(row == c, b_ref[c], bias)

    def body(i, carry):
        acc = jnp.dot(w, x_ref[i], preferred_element_type=jnp.float32)
        o_ref[i] = (acc + bias).astype(o_ref.dtype)
        return carry

    jax.lax.fori_loop(0, nb, body, 0, unroll=nb <= 8)


def _choose_tiling(n, hw, t_hw_max):
    """Pick (nb, t_hw): samples per grid step and spatial tile width."""
    t_hw_max = max(LANE, int(t_hw_max))
    if hw > t_hw_max:
        # Large spatial extent: lane-dense spatial tiling, one sample per step.
        t_hw = (t_hw_max // LANE) * LANE
        nb = 1
    else:
        # Small spatial extent (the real efficientnet case): take the full spatial extent
        # (block == full dim is always legal) and batch samples until the step is ~MiB-scale.
        t_hw = hw
        nb = max(1, min(n, t_hw_max // max(hw, 1)))

    # Guarantee >=2 grid steps when possible so both v7x TensorCores get work.
    if pl.cdiv(n, nb) * pl.cdiv(hw, t_hw) < 2:
        if n >= 2:
            nb = pl.cdiv(n, 2)
        elif hw >= 2 * LANE:
            t_hw = max(LANE, (pl.cdiv(hw, 2) // LANE) * LANE)
        # else: workload too small to split; single step is fine.
    return nb, t_hw


def policy_head_pallas(feats_nchw, weight, bias, *, t_hw_max=4096):
    """1x1 conv head: (N, 320, H, W) -> (N, 2, H, W) logits, NCHW in and out."""
    n, c, h, w = feats_nchw.shape
    assert c == CIN, f"expected {CIN} input channels, got {c}"
    hw = h * w

    # Free (contiguous) reshapes — no transpose, no extra HBM pass.
    x = feats_nchw.reshape(n, CIN, hw)
    # Weight is tiny; cast it to the activation dtype so MXU operand dtypes match
    # (accumulation stays f32 via preferred_element_type).
    w_mat = weight.reshape(COUT, CIN).astype(feats_nchw.dtype)
    b_vec = bias.reshape(COUT).astype(jnp.float32)

    nb, t_hw = _choose_tiling(n, hw, t_hw_max)
    grid_b = pl.cdiv(n, nb)
    grid_hw = pl.cdiv(hw, t_hw)

    # Explicit scoped-VMEM budget: double-buffered activation + output blocks, resident
    # weight, plus headroom. Portable across v5e/v6e/v7x scoped defaults.
    itemsize = jnp.dtype(feats_nchw.dtype).itemsize
    act_bytes = 2 * nb * CIN * t_hw * itemsize
    out_bytes = 2 * nb * COUT * t_hw * itemsize
    w_bytes = 2 * COUT * CIN * itemsize
    vmem_limit = int(max(act_bytes + out_bytes + w_bytes + (4 << 20), 32 << 20))

    out = pl.pallas_call(
        head_conv1x1_kernel,
        out_shape=jax.ShapeDtypeStruct((n, COUT, hw), feats_nchw.dtype),
        grid_spec=pltpu.PrefetchScalarGridSpec(
            num_scalar_prefetch=0,
            grid=(grid_b, grid_hw),
            in_specs=[
                # bias: whole (COUT,) array in SMEM — no padded VMEM tile in the pipeline
                pl.BlockSpec(memory_space=pltpu.MemorySpace.SMEM),
                # weight: resident (constant block index => fetched once)
                pl.BlockSpec((COUT, CIN), lambda b, j: (0, 0)),
                # activations: (nb, CIN, t_hw) block per (batch-block, spatial-tile)
                pl.BlockSpec((nb, CIN, t_hw), lambda b, j: (b, 0, j)),
            ],
            out_specs=pl.BlockSpec((nb, COUT, t_hw), lambda b, j: (b, 0, j)),
        ),
        compiler_params=pltpu.CompilerParams(
            dimension_semantics=("parallel", "parallel"),
            vmem_limit_bytes=vmem_limit,
        ),
    )(b_vec, w_mat, x)

    return out.reshape(n, COUT, h, w)


def policy_net_forward(feats_last, params, **kwargs):
    """Mirrors PolicyNet.forward (head part): returns {'logits': x}."""
    logits = policy_head_pallas(feats_last, params["head_w"], params["head_b"], **kwargs)
    return {"logits": logits}


def init_params(key):
    # nn.Conv2d(320, 2, kernel_size=1): weight (2, 320, 1, 1), bias (2,)
    kw, kb = jax.random.split(key)
    fan_in = CIN * 1 * 1
    bound = 1.0 / jnp.sqrt(fan_in)
    head_w = jax.random.uniform(kw, (COUT, CIN, 1, 1), jnp.float32, -bound, bound)
    head_b = jax.random.uniform(kb, (COUT,), jnp.float32, -bound, bound)
    return {"head_w": head_w, "head_b": head_b}


def _reference(feats, params):
    return (
        jnp.einsum("nchw,oc->nohw", feats, params["head_w"].reshape(COUT, CIN))
        + params["head_b"][None, :, None, None]
    )


if __name__ == "__main__":
    key = jax.random.PRNGKey(0)
    k1, k2, k3, k_param = jax.random.split(key, 4)
    params = init_params(k_param)

    # Small stand-in for efficientnet_lite0 features[-1]: (N=2, C=320, Hf=8, Wf=8).
    # Splits into 2 batch steps (>=2 grid steps for v7x's two TensorCores).
    feats_last = jax.random.normal(k1, (2, CIN, 8, 8), jnp.float32)
    out = policy_net_forward(feats_last, params)
    logits = jax.block_until_ready(out["logits"])
    assert logits.shape == (2, COUT, 8, 8), logits.shape
    assert jnp.allclose(logits, _reference(feats_last, params), atol=1e-4, rtol=1e-4)

    # N=1, HW=400: exercises the explicit spatial tiling + edge-masked path (t_hw=256),
    # and with the default t_hw_max the >=2-step spatial split (t_hw=128, 4 tiles).
    feats2 = jax.random.normal(k2, (1, CIN, 20, 20), jnp.float32)
    for kwargs in ({"t_hw_max": 256}, {}):
        out2 = policy_net_forward(feats2, params, **kwargs)
        logits2 = jax.block_until_ready(out2["logits"])
        assert logits2.shape == (1, COUT, 20, 20), logits2.shape
        assert jnp.allclose(logits2, _reference(feats2, params), atol=1e-4, rtol=1e-4)

    # N=4, tiny spatial extent: exercises the multi-sample (nb=2) batched grid step.
    feats3 = jax.random.normal(k3, (4, CIN, 4, 4), jnp.float32)
    out3 = policy_net_forward(feats3, params)
    logits3 = jax.block_until_ready(out3["logits"])
    assert logits3.shape == (4, COUT, 4, 4), logits3.shape
    assert jnp.allclose(logits3, _reference(feats3, params), atol=1e-4, rtol=1e-4)

    print("KERNEL_OK")
</pallas_src>

<mosaic_0001>
module attributes {stable_mosaic.version = 11 : i64} {
  func.func @head_conv1x1_kernel(%arg0: i32, %arg1: i32, %arg2: memref<2xf32, #tpu.memory_space<smem>>, %arg3: memref<2x320xf32, #tpu.memory_space<vmem>>, %arg4: memref<1x320x64xf32, #tpu.memory_space<vmem>>, %arg5: memref<1x2x64xf32, #tpu.memory_space<vmem>>) attributes {dimension_semantics = [#tpu.dimension_semantics<parallel>, #tpu.dimension_semantics<parallel>], iteration_bounds = array<i64: 2, 1>, scalar_prefetch = 0 : i64, scratch_operands = 0 : i64, tpu.core_type = #tpu.core_type<tc>, window_params = [{transform_indices = @transform_0, window_bounds = array<i64: 2>}, {pipeline_mode = #tpu.pipeline_mode<synchronous>, transform_indices = @transform_1, window_bounds = array<i64: 2, 320>}, {transform_indices = @transform_2, window_bounds = array<i64: 1, 320, 64>}, {transform_indices = @transform_3, window_bounds = array<i64: 1, 2, 64>}]} {
    %c0 = arith.constant 0 : index
    %c0_0 = arith.constant 0 : index
    %0 = vector.load %arg3[%c0, %c0_0] : memref<2x320xf32, #tpu.memory_space<vmem>>, vector<2x320xf32>
    %1 = tpu.iota {dimensions = array<i32: 0>} : vector<2x64xi32>
    %c0_1 = arith.constant 0 : index
    %2 = memref.load %arg2[%c0_1] : memref<2xf32, #tpu.memory_space<smem>>
    %3 = vector.broadcast %2 : f32 to vector<2x64xf32>
    %c1_i32 = arith.constant 1 : i32
    %4 = vector.broadcast %c1_i32 : i32 to vector<2x64xi32>
    %5 = arith.cmpi eq, %1, %4 : vector<2x64xi32>
    %c1 = arith.constant 1 : index
    %6 = memref.load %arg2[%c1] : memref<2xf32, #tpu.memory_space<smem>>
    %7 = vector.broadcast %6 : f32 to vector<2x64xf32>
    %8 = arith.select %5, %7, %3 : vector<2x64xi1>, vector<2x64xf32>
    %c0_i32 = arith.constant 0 : i32
    %9 = arith.index_cast %c0_i32 : i32 to index
    %c0_2 = arith.constant 0 : index
    %c0_3 = arith.constant 0 : index
    %10 = vector.load %arg4[%9, %c0_2, %c0_3] : memref<1x320x64xf32, #tpu.memory_space<vmem>>, vector<1x320x64xf32>
    %11 = vector.shape_cast %10 : vector<1x320x64xf32> to vector<320x64xf32>
    %cst = arith.constant dense<0.000000e+00> : vector<2x64xf32>
    %12 = tpu.matmul %0, %11, %cst {dimension_numbers = #tpu.dot_dimension_numbers<[1], [0], [0], [1], [0, 0, 1, 1], [], []>} : vector<2x320xf32>, vector<320x64xf32>, vector<2x64xf32> -> vector<2x64xf32>
    %13 = arith.addf %12, %8 : vector<2x64xf32>
    %14 = arith.index_cast %c0_i32 : i32 to index
    %c0_4 = arith.constant 0 : index
    %c0_5 = arith.constant 0 : index
    %15 = vector.load %arg5[%14, %c0_4, %c0_5] : memref<1x2x64xf32, #tpu.memory_space<vmem>>, vector<1x2x64xf32>
    %16 = vector.shape_cast %15 : vector<1x2x64xf32> to vector<2x64xf32>
    %17 = vector.shape_cast %13 : vector<2x64xf32> to vector<1x2x64xf32>
    tpu.vector_store %arg5[%14, %c0_4, %c0_5], %17 {strides = array<i32>} : memref<1x2x64xf32, #tpu.memory_space<vmem>>, vector<1x2x64xf32>,
    %c1_i32_6 = arith.constant 1 : i32
    return
  }
  func.func @transform_0(%arg0: i32, %arg1: i32) -> i32 {
    %c0_i32 = arith.constant 0 : i32
    %c0_i32_0 = arith.constant 0 : i32
    return %c0_i32 : i32
  }
  func.func @transform_1(%arg0: i32, %arg1: i32) -> (i32, i32) {
    %c0_i32 = arith.constant 0 : i32
    %c0_i32_0 = arith.constant 0 : i32
    %c0_i32_1 = arith.constant 0 : i32
    return %c0_i32, %c0_i32_0 : i32, i32
  }
  func.func @transform_2(%arg0: i32, %arg1: i32) -> (i32, i32, i32) {
    %c0_i32 = arith.constant 0 : i32
    %c0_i32_0 = arith.constant 0 : i32
    return %arg0, %c0_i32, %arg1 : i32, i32, i32
  }
  func.func @transform_3(%arg0: i32, %arg1: i32) -> (i32, i32, i32) {
    %c0_i32 = arith.constant 0 : i32
    %c0_i32_0 = arith.constant 0 : i32
    return %arg0, %c0_i32, %arg1 : i32, i32, i32
  }
}

</mosaic_0001>

<llo_original>
// kernel: tpu_custom_call.1
$region0: #{tpu_custom_call.1}
  #allocation0 [shape = 'u32[]', space=smem, size = 0x4, offset = 0x4, fixed_abs, tag = 'smem constant byte address 0x4 - core index']
  #allocation1 [shape = 'u32[144,128]{1,0:T(1,128)}', space=vmem, size = 0x12000, scoped, tag = 'internal scratch']
  %s0 = inlined_call_operand.vmem [shape: f32[2], index: 0, kind: input, shape index: {}]
  %s1 = inlined_call_operand.vmem [shape: f32[2,320], index: 1, kind: input, shape index: {}]
  %s2 = inlined_call_operand.vmem [shape: f32[2,320,64], index: 2, kind: input, shape index: {}]
  %s3 = inlined_call_operand.hbm [shape: f32[2,2,64], index: 3, kind: output, shape index: {}]
  %s4 = sld [smem:[#allocation0]]
  $region49: #{tpu_custom_call.1} parent=0
    _
  %s6 = ssub.s32 1, %s4
  %s7 = scalar_select 0, %s6, %s4
  $region1: #{tpu_custom_call.1} parent=0
    #allocation2 [shape = 'u8[512]{0}', space=smem, size = 0x200, scoped, tag = 'input window, operand 0, single buffered']
    #allocation3 [shape = 's32[2]{0}', space=sflag, size = 0x8, scoped, tag = 'scoped memory for tpu_custom_call.1']
    #allocation4 [shape = 's32[2]{0}', space=sflag, size = 0x8, scoped, tag = 'scoped memory for tpu_custom_call.1']
    #allocation5 [shape = 'u8[2048]{0}', space=vmem, size = 0x800, scoped, tag = 'output window, operand 0']
    %8 = vsyncpa [#allocation4], 0
    %9 = vsyncpa [#allocation3], 0
    %s10 = scalar_lea.sflag [#allocation3], 1
    %11 = vsyncpa %s10, 0
    loop: start=0, step=1, limit=4
    $region2: #{tpu_custom_call.1} parent=1 // loop_pre_header
      _
    $region3: #{tpu_custom_call.1} parent=1 // loop_header
      %s13 = sphi 0, %s17
      %p14 = scmp.ge.s32.totalorder %s13, 4
      %s20 = sphi 0, %s32
      %s21 = sphi 0, %s28
      %s22 = sphi 0, %s20
      %s23 = sphi 0, %s21
      %s24 = sphi 0, %s22
      %s25 = sphi 0, %s23
      %s33 = sphi 0, %s33
      %s35 = sphi 0, %s33
      %s36 = sphi 0, %s35
      %s50 = sphi 0, %s36
      %s54 = sphi 0, %s54
      %s56 = sphi 0, %s54
      %s57 = sphi 0, %s56
      %s71 = sphi 0, %s57
      %s79 = sphi 0, %s81
      %s82 = sphi 0, %s79
      %s83 = sphi 0, %s82
      %s99 = sphi 0, %s83
      %s107 = sphi 0, %s109
      %s110 = sphi 0, %s107
      %s111 = sphi 0, %s110
      %s127 = sphi 0, %s111
    $region4: #{tpu_custom_call.1} parent=1 // loop_header_branch
      %16 = sbr.rel (%p14) target = $region8
    $region5: #{tpu_custom_call.1} parent=1 // loop_body
      %s18 = ssub.s32 %s13, 1
      %s19 = ssub.s32 %s13, 2
      %s26 = sadd.s32 1, %s21
      %p27 = scmp.ge.s32.totalorder %s26, 1
      %s28 = scalar_select %p27, 0, %s26
      %s29 = sadd.s32 1, %s20
      %s30 = scalar_select %p27, %s29, %s20
      %p31 = scmp.ge.s32.totalorder %s30, 2
      %s32 = scalar_select %p31, 0, %s30
      %s34 = sadd.s32 %s33, 1
      %p37 = scmp.eq.s32.totalorder %s13, 1
      %p38 = scmp.ne.s32.totalorder %s33, %s35
      %p39 = scmp.eq.s32.totalorder %s13, 0
      %p40 = por %p38, %p39
      %p41 = scmp.ne.s32.totalorder %s33, %s35
      %p42 = scmp.eq.s32.totalorder %s18, 1
      %p43 = por %p41, %p42
      %p44 = scmp.ne.s32.totalorder %s35, %s36
      %p45 = scmp.eq.s32.totalorder %s18, 0
      %p46 = por %p44, %p45
      %p47 = scmp.ne.s32.totalorder %s35, %s36
      %p48 = scmp.eq.s32.totalorder %s19, 1
      %p49 = por %p47, %p48
      %p51 = scmp.ne.s32.totalorder %s36, %s50
      %p52 = scmp.eq.s32.totalorder %s19, 0
      %p53 = por %p51, %p52
      %s55 = sadd.s32 %s54, 1
      %p58 = scmp.eq.s32.totalorder %s13, 1
      %p59 = scmp.ne.s32.totalorder %s54, %s56
      %p60 = scmp.eq.s32.totalorder %s13, 0
      %p61 = por %p59, %p60
      %p62 = scmp.ne.s32.totalorder %s54, %s56
      %p63 = scmp.eq.s32.totalorder %s18, 1
      %p64 = por %p62, %p63
      %p65 = scmp.ne.s32.totalorder %s56, %s57
      %p66 = scmp.eq.s32.totalorder %s18, 0
      %p67 = por %p65, %p66
      %p68 = scmp.ne.s32.totalorder %s56, %s57
      %p69 = scmp.eq.s32.totalorder %s19, 1
      %p70 = por %p68, %p69
      %p72 = scmp.ne.s32.totalorder %s57, %s71
      %p73 = scmp.eq.s32.totalorder %s19, 0
      %p74 = por %p72, %p73
      %s75 = ssub.s32 %s20, %s32
      %s76 = ssub.s32 %s21, %s28
      %s77 = sor.u32 %s75, %s76
      %p78 = scmp.eq.s32.totalorder %s77, 0
      %s80 = sadd.s32 %s79, 1
      %s81 = scalar_select %p78, %s79, %s80
      %p84 = pneg %p78
      %p85 = scmp.eq.s32.totalorder %s13, 1
      %p86 = por %p84, %p85
      %p87 = scmp.ne.s32.totalorder %s79, %s82
      %p88 = scmp.eq.s32.totalorder %s13, 0
      %p89 = por %p87, %p88
      %p90 = scmp.ne.s32.totalorder %s79, %s82
      %p91 = scmp.eq.s32.totalorder %s18, 1
      %p92 = por %p90, %p91
      %p93 = scmp.ne.s32.totalorder %s82, %s83
      %p94 = scmp.eq.s32.totalorder %s18, 0
      %p95 = por %p93, %p94
      %p96 = scmp.ne.s32.totalorder %s82, %s83
      %p97 = scmp.eq.s32.totalorder %s19, 1
      %p98 = por %p96, %p97
      %p100 = scmp.ne.s32.totalorder %s83, %s99
      %p101 = scmp.eq.s32.totalorder %s19, 0
      %p102 = por %p100, %p101
      %s103 = ssub.s32 %s20, %s32
      %s104 = ssub.s32 %s21, %s28
      %s105 = sor.u32 %s103, %s104
      %p106 = scmp.eq.s32.totalorder %s105, 0
      %s108 = sadd.s32 %s107, 1
      %s109 = scalar_select %p106, %s107, %s108
      %p112 = pneg %p106
      %p113 = scmp.eq.s32.totalorder %s13, 1
      %p114 = por %p112, %p113
      %p115 = scmp.ne.s32.totalorder %s107, %s110
      %p116 = scmp.eq.s32.totalorder %s13, 0
      %p117 = por %p115, %p116
      %p118 = scmp.ne.s32.totalorder %s107, %s110
      %p119 = scmp.eq.s32.totalorder %s18, 1
      %p120 = por %p118, %p119
      %p121 = scmp.ne.s32.totalorder %s110, %s111
      %p122 = scmp.eq.s32.totalorder %s18, 0
      %p123 = por %p121, %p122
      %p124 = scmp.ne.s32.totalorder %s110, %s111
      %p125 = scmp.eq.s32.totalorder %s19, 1
      %p126 = por %p124, %p125
      %p128 = scmp.ne.s32.totalorder %s111, %s127
      %p129 = scmp.eq.s32.totalorder %s19, 0
      %p130 = por %p128, %p129
      %p131 = scmp.le.s32.totalorder 1, %s13
      %p132 = scmp.lt.s32.totalorder %s13, 3
      %p133 = pnand %p131, %p132
      %p134 = pneg %p133
      // Predicated region
      $region9: #{tpu_custom_call.1} parent=5 // pred_check
        _
      $region10: #{tpu_custom_call.1} parent=5 // pred_check_branch
        %136 = sbr.rel (%p133) target = $region12
      $region11: #{tpu_custom_call.1} parent=5 // pred_region
        %s137 = ssub.s32 %s13, 1
        // Predicated region
        $region13: #{tpu_custom_call.1} parent=11 // pred_check
          %p138 = pneg %p46
        $region14: #{tpu_custom_call.1} parent=11 // pred_check_branch
          %140 = sbr.rel (%p138) target = $region16
        $region15: #{tpu_custom_call.1} parent=11 // pred_region
          %s142 = ssub.s32 16, 16
          %143 = vsyncadd [#allocation4], %s142
          %s145 = sshll.u32 %s0, 4
          %s146 = int_to_ptr.vmem [resolvable:$true] %s145
          %148 = dma.vmem_to_smem %s146, 16, [#allocation2], [#allocation4]
        $region16: #{tpu_custom_call.1} parent=11 // pred_fallthru
          _
        // Predicated region
        $region17: #{tpu_custom_call.1} parent=11 // pred_check
          %p149 = pneg %p67
        $region18: #{tpu_custom_call.1} parent=11 // pred_check_branch
          %151 = sbr.rel (%p149) target = $region20
        $region19: #{tpu_custom_call.1} parent=11 // pred_region
          _
        $region20: #{tpu_custom_call.1} parent=11 // pred_fallthru
          _
      $region12: #{tpu_custom_call.1} parent=5 // pred_fallthru
        _
      %p152 = scmp.lt.s32.totalorder %s13, 2
      // Predicated region
      $region21: #{tpu_custom_call.1} parent=5 // pred_check
        %p153 = pneg %p152
      $region22: #{tpu_custom_call.1} parent=5 // pred_check_branch
        %155 = sbr.rel (%p153) target = $region24
      $region23: #{tpu_custom_call.1} parent=5 // pred_region
        // Predicated region
        $region25: #{tpu_custom_call.1} parent=23 // pred_check
          %p156 = pneg %p89
        $region26: #{tpu_custom_call.1} parent=23 // pred_check_branch
          %158 = sbr.rel (%p156) target = $region28
        $region27: #{tpu_custom_call.1} parent=23 // pred_region
          %p159 = scmp.lt.s32.totalorder %s20, 1
          %s160 = scalar_select %p159, %s20, 1
          %p161 = scmp.lt.s32.totalorder %s21, 0
          %s162 = scalar_select %p161, %s21, 0
          %s163 = smul.addr %s160, 40
          %s164 = sadd.s32 %s162, %s163
          %s165 = smul.addr %s164, 8
          %s166 = scalar_lea.vmem %s2, %s165
        $region28: #{tpu_custom_call.1} parent=23 // pred_fallthru
          _
      $region24: #{tpu_custom_call.1} parent=5 // pred_fallthru
        _
      %p167 = scmp.le.s32.totalorder 1, %s13
      %p168 = scmp.lt.s32.totalorder %s13, 3
      %p169 = pnand %p167, %p168
      %p170 = pneg %p169
      // Predicated region
      $region29: #{tpu_custom_call.1} parent=5 // pred_check
        _
      $region30: #{tpu_custom_call.1} parent=5 // pred_check_branch
        %172 = sbr.rel (%p169) target = $region32
      $region31: #{tpu_custom_call.1} parent=5 // pred_region
        %s173 = ssub.s32 %s13, 1
        // Predicated region
        $region33: #{tpu_custom_call.1} parent=31 // pred_check
          %p174 = pneg %p46
        $region34: #{tpu_custom_call.1} parent=31 // pred_check_branch
          %176 = sbr.rel (%p174) target = $region36
        $region35: #{tpu_custom_call.1} parent=31 // pred_region
          %177 = dma.done [#allocation4], 16
        $region36: #{tpu_custom_call.1} parent=31 // pred_fallthru
          _
        %178 = sfence
        %p179 = pneg %p46
        %p180 = pneg %p43
        %p181 = pneg %p67
        %p182 = pneg %p64
        %p183 = scmp.lt.s32.totalorder %s22, 1
        %s184 = scalar_select %p183, %s22, 1
        %p185 = scmp.lt.s32.totalorder %s23, 0
        %s186 = scalar_select %p185, %s23, 0
        %s187 = smul.addr %s184, 40
        %s188 = sadd.s32 %s186, %s187
        %s189 = smul.addr %s188, 8
        %s190 = scalar_lea.vmem %s2, %s189
        %p191 = pneg %p95
        %p192 = pneg %p92
        %p193 = pneg %p123
        %p194 = pneg %p120
        %s195 = sand.u32 %s110, 1
        %s196 = scalar_lea.sflag [#allocation3], %s195
        %s197 = sand.u32 %s110, 1
        %s198 = smul.addr %s197, 2
        %s199 = scalar_lea.vmem [#allocation5], %s198
        %p200 = scmp.lt.s32.totalorder %s22, 1
        %s201 = scalar_select %p200, %s22, 1
        %p202 = scmp.lt.s32.totalorder %s23, 0
        %s203 = scalar_select %p202, %s23, 0
        %s204 = smul.addr %s201, 40
        %s205 = sadd.s32 %s203, %s204
        %s206 = smul.addr %s205, 8
        %s207 = scalar_lea.vmem %s2, %s206
        %v208 = vld [vmem:[%s1] sm:$0x3f]
        %v209 = vlaneseq
        %v210 = vshrl.u32 %v209, 7
        %s211 = sld [smem:[#allocation2]]
        %v212 = vstv %s211
        %vm213 = vcmp.eq.s32.totalorder %v210, 1
        %s214 = sld [smem:[#allocation2 + $0x1]]
        %v215 = vstv %s214
        %v216 = vsel %vm213, %v215, %v212
        %v217 = vld [vmem:[%s207] sm:$0xff]
        %v218 = vld [vmem:[%s207 + $0x8] sm:$0xff]
        %v219 = vld [vmem:[%s207 + $0x10] sm:$0xff]
        %v220 = vld [vmem:[%s207 + $0x18] sm:$0xff]
        %v221 = vld [vmem:[%s207 + $0x20] sm:$0xff]
        %v222 = vld [vmem:[%s207 + $0x28] sm:$0xff]
        %v223 = vld [vmem:[%s207 + $0x30] sm:$0xff]
        %v224 = vld [vmem:[%s207 + $0x38] sm:$0xff]
        %v225 = vld [vmem:[%s207 + $0x40] sm:$0xff]
        %v226 = vld [vmem:[%s207 + $0x48] sm:$0xff]
        %v227 = vld [vmem:[%s207 + $0x50] sm:$0xff]
        %v228 = vld [vmem:[%s207 + $0x58] sm:$0xff]
        %v229 = vld [vmem:[%s207 + $0x60] sm:$0xff]
        %v230 = vld [vmem:[%s207 + $0x68] sm:$0xff]
        %v231 = vld [vmem:[%s207 + $0x70] sm:$0xff]
        %v232 = vld [vmem:[%s207 + $0x78] sm:$0xff]
        %v233 = vld [vmem:[%s207 + $0x80] sm:$0xff]
        %v234 = vld [vmem:[%s207 + $0x88] sm:$0xff]
        %v235 = vld [vmem:[%s207 + $0x90] sm:$0xff]
        %v236 = vld [vmem:[%s207 + $0x98] sm:$0xff]
        %v237 = vld [vmem:[%s207 + $0xa0] sm:$0xff]
        %v238 = vld [vmem:[%s207 + $0xa8] sm:$0xff]
        %v239 = vld [vmem:[%s207 + $0xb0] sm:$0xff]
        %v240 = vld [vmem:[%s207 + $0xb8] sm:$0xff]
        %v241 = vld [vmem:[%s207 + $0xc0] sm:$0xff]
        %v242 = vld [vmem:[%s207 + $0xc8] sm:$0xff]
        %v243 = vld [vmem:[%s207 + $0xd0] sm:$0xff]
        %v244 = vld [vmem:[%s207 + $0xd8] sm:$0xff]
        %v245 = vld [vmem:[%s207 + $0xe0] sm:$0xff]
        %v246 = vld [vmem:[%s207 + $0xe8] sm:$0xff]
        %v247 = vld [vmem:[%s207 + $0xf0] sm:$0xff]
        %v248 = vld [vmem:[%s207 + $0xf8] sm:$0xff]
        %v249 = vld [vmem:[%s207 + $0x100] sm:$0xff]
        %v250 = vld [vmem:[%s207 + $0x108] sm:$0xff]
        %v251 = vld [vmem:[%s207 + $0x110] sm:$0xff]
        %v252 = vld [vmem:[%s207 + $0x118] sm:$0xff]
        %v253 = vld [vmem:[%s207 + $0x120] sm:$0xff]
        %v254 = vld [vmem:[%s207 + $0x128] sm:$0xff]
        %v255 = vld [vmem:[%s207 + $0x130] sm:$0xff]
        %v256 = vld [vmem:[%s207 + $0x138] sm:$0xff]
        %v258 = vcombine.high %v208, %v208
        %v260 = vunpack.c.l.s4 1983009808
        %v261 = vunpack.c.0.s8 %v260
        %v262 = vlaneseq
        %v263 = vshrl.u32 %v262, 7
        %v264 = vsub.s32 %v261, %v263
        %v265 = vrot.slane %v208, %v264
        %v267 = vunpack.c.l.s4 1983009808
        %v268 = vunpack.c.0.s8 %v267
        %v269 = vlaneseq
        %v270 = vshrl.u32 %v269, 7
        %v271 = vsub.s32 %v268, %v270
        %v272 = vrot.slane %v258, %v271
        %v273 = vcombine.high %v265, %v265
        %vm276 = vcmask 523264
        %v277 = vsel %vm276, %v272, 0
        %279 = vmatprep.subr.mxu0 0.0
        %280 = vmatpush1.msra.mxu0 %v217
        %281 = vmatprep.subr.mxu0 0.0
        %282 = vmatpush1.msra.mxu0 %v218
        %283 = vmatprep.subr.mxu0 0.0
        %284 = vmatpush1.msra.mxu0 %v219
        %285 = vmatprep.subr.mxu0 0.0
        %286 = vmatpush1.msra.mxu0 %v220
        %287 = vmatprep.subr.mxu0 0.0
        %288 = vmatpush1.msra.mxu0 %v221
        %289 = vmatprep.subr.mxu0 0.0
        %290 = vmatpush1.msra.mxu0 %v222
        %291 = vmatprep.subr.mxu0 0.0
        %292 = vmatpush1.msra.mxu0 %v223
        %293 = vmatprep.subr.mxu0 0.0
        %294 = vmatpush1.msra.mxu0 %v224
        %295 = vmatprep.subr.mxu0 0.0
        %296 = vmatpush1.msra.mxu0 %v225
        %297 = vmatprep.subr.mxu0 0.0
        %298 = vmatpush1.msra.mxu0 %v226
        %299 = vmatprep.subr.mxu0 0.0
        %300 = vmatpush1.msra.mxu0 %v227
        %301 = vmatprep.subr.mxu0 0.0
        %302 = vmatpush1.msra.mxu0 %v228
        %303 = vmatprep.subr.mxu0 0.0
        %304 = vmatpush1.msra.mxu0 %v229
        %305 = vmatprep.subr.mxu0 0.0
        %306 = vmatpush1.msra.mxu0 %v230
        %307 = vmatprep.subr.mxu0 0.0
        %308 = vmatpush1.msra.mxu0 %v231
        %309 = vmatprep.subr.mxu0 0.0
        %310 = vmatpush1.msra.mxu0 %v232
        %311 = vmatprep.subr.mxu0 0.0
        %312 = vmatpush1.msra.mxu0 %v233
        %313 = vmatprep.subr.mxu0 0.0
        %314 = vmatpush1.msra.mxu0 %v234
        %315 = vmatprep.subr.mxu0 0.0
        %316 = vmatpush1.msra.mxu0 %v235
        %317 = vmatprep.subr.mxu0 0.0
        %318 = vmatpush1.msra.mxu0 %v236
        %319 = vmatprep.subr.mxu0 0.0
        %320 = vmatpush1.msra.mxu0 %v237
        %321 = vmatprep.subr.mxu0 0.0
        %322 = vmatpush1.msra.mxu0 %v238
        %323 = vmatprep.subr.mxu0 0.0
        %324 = vmatpush1.msra.mxu0 %v239
        %325 = vmatprep.subr.mxu0 0.0
        %326 = vmatpush1.msra.mxu0 %v240
        %327 = vmatprep.subr.mxu0 0.0
        %328 = vmatpush1.msra.mxu0 %v241
        %329 = vmatprep.subr.mxu0 0.0
        %330 = vmatpush1.msra.mxu0 %v242
        %331 = vmatprep.subr.mxu0 0.0
        %332 = vmatpush1.msra.mxu0 %v243
        %333 = vmatprep.subr.mxu0 0.0
        %334 = vmatpush1.msra.mxu0 %v244
        %335 = vmatprep.subr.mxu0 0.0
        %336 = vmatpush1.msra.mxu0 %v245
        %337 = vmatprep.subr.mxu0 0.0
        %338 = vmatpush1.msra.mxu0 %v246
        %339 = vmatprep.subr.mxu0 0.0
        %340 = vmatpush1.msra.mxu0 %v247
        %341 = vmatprep.subr.mxu0 0.0
        %342 = vmatpush1.msra.mxu0 %v248
        %343 = vmatprep.mubr.f32.mxu0 %v273
        %344 = vmatmul.mubr.f32.gmra.mrb[0].mxu0 %v265
        %v345 = vpop.f32.mrb[0].mxu0
        %v346 = vadd.f32 %v216, %v345
        %v347 = vpop.f32.mrb[0].mxu0
        %348 = vdwg.mxu0
        %349 = vmatprep.subr.mxu0 0.0
        %350 = vmatpush1.msra.mxu0 %v249
        %351 = vmatprep.subr.mxu0 0.0
        %352 = vmatpush1.msra.mxu0 %v250
        %353 = vmatprep.subr.mxu0 0.0
        %354 = vmatpush1.msra.mxu0 %v251
        %355 = vmatprep.subr.mxu0 0.0
        %356 = vmatpush1.msra.mxu0 %v252
        %357 = vmatprep.subr.mxu0 0.0
        %358 = vmatpush1.msra.mxu0 %v253
        %359 = vmatprep.subr.mxu0 0.0
        %360 = vmatpush1.msra.mxu0 %v254
        %361 = vmatprep.subr.mxu0 0.0
        %362 = vmatpush1.msra.mxu0 %v255
        %363 = vmatprep.subr.mxu0 0.0
        %364 = vmatpush1.msra.mxu0 %v256
        %365 = vmatprep.subr.mxu0 0.0
        %366 = vmatpush1.msra.mxu0 0.0
        %367 = vmatprep.subr.mxu0 0.0
        %368 = vmatpush1.msra.mxu0 0.0
        %369 = vmatprep.subr.mxu0 0.0
        %370 = vmatpush1.msra.mxu0 0.0
        %371 = vmatprep.subr.mxu0 0.0
        %372 = vmatpush1.msra.mxu0 0.0
        %373 = vmatprep.subr.mxu0 0.0
        %374 = vmatpush1.msra.mxu0 0.0
        %375 = vmatprep.subr.mxu0 0.0
        %376 = vmatpush1.msra.mxu0 0.0
        %377 = vmatprep.subr.mxu0 0.0
        %378 = vmatpush1.msra.mxu0 0.0
        %379 = vmatprep.subr.mxu0 0.0
        %380 = vmatpush1.msra.mxu0 0.0
        %381 = vmatprep.subr.mxu0 0.0
        %382 = vmatpush1.msra.mxu0 0.0
        %383 = vmatprep.subr.mxu0 0.0
        %384 = vmatpush1.msra.mxu0 0.0
        %385 = vmatprep.subr.mxu0 0.0
        %386 = vmatpush1.msra.mxu0 0.0
        %387 = vmatprep.subr.mxu0 0.0
        %388 = vmatpush1.msra.mxu0 0.0
        %389 = vmatprep.subr.mxu0 0.0
        %390 = vmatpush1.msra.mxu0 0.0
        %391 = vmatprep.subr.mxu0 0.0
        %392 = vmatpush1.msra.mxu0 0.0
        %393 = vmatprep.subr.mxu0 0.0
        %394 = vmatpush1.msra.mxu0 0.0
        %395 = vmatprep.subr.mxu0 0.0
        %396 = vmatpush1.msra.mxu0 0.0
        %397 = vmatprep.subr.mxu0 0.0
        %398 = vmatpush1.msra.mxu0 0.0
        %399 = vmatprep.subr.mxu0 0.0
        %400 = vmatpush1.msra.mxu0 0.0
        %401 = vmatprep.subr.mxu0 0.0
        %402 = vmatpush1.msra.mxu0 0.0
        %403 = vmatprep.subr.mxu0 0.0
        %404 = vmatpush1.msra.mxu0 0.0
        %405 = vmatprep.subr.mxu0 0.0
        %406 = vmatpush1.msra.mxu0 0.0
        %407 = vmatprep.subr.mxu0 0.0
        %408 = vmatpush1.msra.mxu0 0.0
        %409 = vmatprep.subr.mxu0 0.0
        %410 = vmatpush1.msra.mxu0 0.0
        %411 = vmatprep.subr.mxu0 0.0
        %412 = vmatpush1.msra.mxu0 0.0
        %413 = vmatprep.mubr.f32.mxu0 0.0
        %414 = vmatmul.mubr.f32.gmra.mrb[0].mxu0 %v277
        %v415 = vpop.f32.mrb[0].mxu0
        %v416 = vadd.f32 %v346, %v415
        %v417 = vpop.f32.mrb[0].mxu0
        %418 = vdwg.mxu0
        %vm419 = vcmask 517120
        %420 = vst.msk [vmem:[%s199] sm:$0x3] %vm419, %v416
        %s421 = sand.u32 %s110, 1
        %s422 = scalar_lea.sflag [#allocation3], %s421
        %s423 = sand.u32 %s110, 1
        %s424 = smul.addr %s423, 2
        %s425 = scalar_lea.vmem [#allocation5], %s424
        // Predicated region
        $region37: #{tpu_custom_call.1} parent=31 // pred_check
          %p426 = pneg %p120
        $region38: #{tpu_custom_call.1} parent=31 // pred_check_branch
          %428 = sbr.rel (%p426) target = $region40
        $region39: #{tpu_custom_call.1} parent=31 // pred_region
          %s430 = ssub.s32 32, 32
          %431 = vsyncadd %s422, %s430
          %s432 = sadd.s32 %s23, %s22
          %s433 = smul.addr %s432, 32
          %s434 = scalar_lea.hbm %s3, %s433
          %s436 = sshll.u32 %s425, 4
          %s437 = int_to_ptr.vmem [resolvable:$true] %s436
          %439 = dma.vmem_to_hbm [thread:$0]  %s437, 32, %s434, %s422
        $region40: #{tpu_custom_call.1} parent=31 // pred_fallthru
          _
      $region32: #{tpu_custom_call.1} parent=5 // pred_fallthru
        _
      %p440 = scmp.le.s32.totalorder 2, %s13
      // Predicated region
      $region41: #{tpu_custom_call.1} parent=5 // pred_check
        %p441 = pneg %p440
      $region42: #{tpu_custom_call.1} parent=5 // pred_check_branch
        %443 = sbr.rel (%p441) target = $region44
      $region43: #{tpu_custom_call.1} parent=5 // pred_region
        %s444 = ssub.s32 %s13, 2
        // Predicated region
        $region45: #{tpu_custom_call.1} parent=43 // pred_check
          %p445 = pneg %p126
        $region46: #{tpu_custom_call.1} parent=43 // pred_check_branch
          %447 = sbr.rel (%p445) target = $region48
        $region47: #{tpu_custom_call.1} parent=43 // pred_region
          %s448 = sand.u32 %s111, 1
          %s449 = scalar_lea.sflag [#allocation3], %s448
          %s450 = sand.u32 %s111, 1
          %s451 = smul.addr %s450, 2
          %s452 = scalar_lea.vmem [#allocation5], %s451
          %453 = dma.done %s449, 32
        $region48: #{tpu_custom_call.1} parent=43 // pred_fallthru
          _
      $region44: #{tpu_custom_call.1} parent=5 // pred_fallthru
        _
    $region6: #{tpu_custom_call.1} parent=1 // loop_footer
      %s17 = sadd.s32 1, %s13
    $region7: #{tpu_custom_call.1} parent=1 // loop_footer_branch
      %12 = sbr.rel target = $region3
    $region8: #{tpu_custom_call.1} parent=1 // loop_exit
      _
    %454 = vsyncpa [#allocation3], 1
    %s455 = scalar_lea.sflag [#allocation3], 1
    %456 = vsyncpa %s455, 1
    %457 = vsyncpa [#allocation4], 1
    %s458 = scalar_lea.sflag [#allocation4], 1
    %459 = vsyncpa %s458, 1

</llo_original>
